<compile_context>
chip_gen: v7x
topology: tpu7x:2x2x1
jax: 0.10.0
libtpu: 0.0.40
codegen_flags: <defaults>
</compile_context>

<pallas_src>
import functools

import jax
import jax.numpy as jnp
import numpy as np
from jax import lax
from jax.experimental import pallas as pl
from jax.experimental.pallas import tpu as pltpu

EPS = 1e-5           # nn.BatchNorm2d default eps
NEG_SLOPE = 0.01     # nn.LeakyReLU default negative_slope
_VMEM_LIMIT = 48 * 1024 * 1024   # above 16/32 MiB defaults, < v7x 64 MiB physical


def _leaky(x):
    return jnp.where(x >= 0, x, NEG_SLOPE * x)


# --------------- pass 1: 1x1 conv + BN1 partial stats (sum, sumsq) ----------
def _conv1_stats_kernel(x_ref, w1_ref, mid_ref, s1_ref, ss1_ref):
    @pl.when(pl.program_id(0) == 0)
    def _init():
        s1_ref[...] = jnp.zeros_like(s1_ref)
        ss1_ref[...] = jnp.zeros_like(ss1_ref)

    x = x_ref[...].astype(jnp.bfloat16)                      # [tm, C]
    mid = jnp.dot(x, w1_ref[...],                            # bf16 MXU, f32 accum
                  preferred_element_type=jnp.float32)        # [tm, Cm]
    mid_ref[...] = mid
    # one-pass stats: sum and sum-of-squares (var = E[x^2] - mu^2 later)
    s1_ref[...] += jnp.sum(mid, axis=0, keepdims=True)
    ss1_ref[...] += jnp.sum(mid * mid, axis=0, keepdims=True)


# ---- pass 2: BN1 affine + LeakyReLU + 3x3 conv + BN2 partial stats ---------
def _conv2_stats_kernel(mid_ref, w2_ref, s1_ref, ss1_ref, g1_ref, b1_ref,
                        y_ref, s2_ref, ss2_ref, pad_ref, *, count):
    n = pl.program_id(0)
    _, H, W, Cm = mid_ref.shape
    C = y_ref.shape[3]

    @pl.when(n == 0)
    def _init():
        # Zero the halo scratch ONCE per call; only the interior is rewritten
        # each grid step, so the 1-element border stays zero (SAME padding).
        pad_ref[...] = jnp.zeros_like(pad_ref)
        s2_ref[...] = jnp.zeros_like(s2_ref)
        ss2_ref[...] = jnp.zeros_like(ss2_ref)

    # finalize BN1 from the globally accumulated stats (biased variance)
    inv_n = 1.0 / count
    mu1 = s1_ref[...] * inv_n                                # [1, Cm]
    var1 = ss1_ref[...] * inv_n - mu1 * mu1
    a1 = g1_ref[...] * lax.rsqrt(var1 + EPS)
    c1 = b1_ref[...] - a1 * mu1

    m = mid_ref[0]                                           # [H, W, Cm] f32
    m = a1.reshape(1, 1, Cm) * m + c1.reshape(1, 1, Cm)
    m = _leaky(m)
    pad_ref[1:H + 1, 1:W + 1, :] = m                         # interior only

    # 3x3 conv: 9 shifted taps, bf16 MXU operands, single f32 accumulator.
    # TODO(synk): fuse the 9 taps into one K=9*Cm im2col matmul once unaligned
    # minor-dim concatenation is guaranteed on all targeted Mosaic versions.
    acc = jnp.zeros((H * W, C), jnp.float32)
    for kh in range(3):
        for kw in range(3):
            patch = pad_ref[kh:kh + H, kw:kw + W, :].reshape(H * W, Cm)
            acc = acc + jnp.dot(patch.astype(jnp.bfloat16), w2_ref[kh, kw],
                                preferred_element_type=jnp.float32)

    y_ref[...] = acc.reshape(1, H, W, C)
    s2_ref[...] += jnp.sum(acc, axis=0, keepdims=True)
    ss2_ref[...] += jnp.sum(acc * acc, axis=0, keepdims=True)


# ------------------- pass 3: BN2 + residual add + LeakyReLU -----------------
def _bn2_residual_kernel(x_ref, y_ref, s2_ref, ss2_ref, g2_ref, b2_ref, o_ref,
                         *, count):
    inv_n = 1.0 / count
    mu2 = s2_ref[...] * inv_n
    var2 = ss2_ref[...] * inv_n - mu2 * mu2
    a2 = g2_ref[...] * lax.rsqrt(var2 + EPS)
    c2 = b2_ref[...] - a2 * mu2
    out = a2 * y_ref[...] + c2 + x_ref[...]                  # BN2 + residual
    o_ref[...] = _leaky(out)


def _row_tile(total, target):
    """Largest multiple of 8 that divides `total` and is <= target (else total)."""
    t = min(total, max(target, 8))
    t -= t % 8
    while t >= 8:
        if total % t == 0:
            return t
        t -= 8
    return total


def residual_block(x, w1, w2, g1, b1, g2, b2, *, row_tile=512):
    """ResidualBlock forward (training-mode BatchNorm).

    x : [N, H, W, C] float32, NHWC (channels-last view of torch's NCHW input)
    w1: [C, Cm]       1x1 conv weight (torch [Cm, C, 1, 1] -> [C, Cm])
    w2: [3, 3, Cm, C] 3x3 conv weight, HWIO (torch [C, Cm, 3, 3] -> (2,3,1,0))
    g1, b1: [Cm] BN1 gamma/beta      g2, b2: [C] BN2 gamma/beta
    """
    N, H, W, C = x.shape
    Cm = w1.shape[1]
    nhw = N * H * W
    tm = _row_tile(nhw, row_tile)
    count = float(nhw)

    xf = x.reshape(nhw, C)
    w1b = w1.astype(jnp.bfloat16)
    w2b = w2.astype(jnp.bfloat16)

    reduce_params = pltpu.CompilerParams(
        dimension_semantics=("arbitrary",), vmem_limit_bytes=_VMEM_LIMIT)
    parallel_params = pltpu.CompilerParams(
        dimension_semantics=("parallel",), vmem_limit_bytes=_VMEM_LIMIT)

    # ---- pass 1: 1x1 conv + BN1 sum / sumsq (grid over row tiles) ----
    mid_flat, s1, ss1 = pl.pallas_call(
        _conv1_stats_kernel,
        grid=(nhw // tm,),
        in_specs=[pl.BlockSpec((tm, C), lambda i: (i, 0)),
                  pl.BlockSpec((C, Cm), lambda i: (0, 0))],
        out_specs=(pl.BlockSpec((tm, Cm), lambda i: (i, 0)),
                   pl.BlockSpec((1, Cm), lambda i: (0, 0)),
                   pl.BlockSpec((1, Cm), lambda i: (0, 0))),
        out_shape=(jax.ShapeDtypeStruct((nhw, Cm), jnp.float32),
                   jax.ShapeDtypeStruct((1, Cm), jnp.float32),
                   jax.ShapeDtypeStruct((1, Cm), jnp.float32)),
        compiler_params=reduce_params,
    )(xf, w1b)

    # ---- pass 2: BN1 + LeakyReLU + 3x3 conv + BN2 sum / sumsq (grid over N) --
    # TODO(synk): tile H with a halo for images too large to keep (H, W, Cm)
    # resident in VMEM; one image per grid step is plenty at these sizes.
    mid = mid_flat.reshape(N, H, W, Cm)
    y, s2, ss2 = pl.pallas_call(
        functools.partial(_conv2_stats_kernel, count=count),
        grid=(N,),
        in_specs=[pl.BlockSpec((1, H, W, Cm), lambda n: (n, 0, 0, 0)),
                  pl.BlockSpec((3, 3, Cm, C), lambda n: (0, 0, 0, 0)),
                  pl.BlockSpec((1, Cm), lambda n: (0, 0)),
                  pl.BlockSpec((1, Cm), lambda n: (0, 0)),
                  pl.BlockSpec((1, Cm), lambda n: (0, 0)),
                  pl.BlockSpec((1, Cm), lambda n: (0, 0))],
        out_specs=(pl.BlockSpec((1, H, W, C), lambda n: (n, 0, 0, 0)),
                   pl.BlockSpec((1, C), lambda n: (0, 0)),
                   pl.BlockSpec((1, C), lambda n: (0, 0))),
        out_shape=(jax.ShapeDtypeStruct((N, H, W, C), jnp.float32),
                   jax.ShapeDtypeStruct((1, C), jnp.float32),
                   jax.ShapeDtypeStruct((1, C), jnp.float32)),
        scratch_shapes=[pltpu.VMEM((H + 2, W + 2, Cm), jnp.float32)],
        compiler_params=reduce_params,
    )(mid, w2b, s1, ss1, g1.reshape(1, Cm), b1.reshape(1, Cm))

    # ---- pass 3: BN2 + residual + LeakyReLU (grid over row tiles, parallel) --
    out_flat = pl.pallas_call(
        functools.partial(_bn2_residual_kernel, count=count),
        grid=(nhw // tm,),
        in_specs=[pl.BlockSpec((tm, C), lambda i: (i, 0)),
                  pl.BlockSpec((tm, C), lambda i: (i, 0)),
                  pl.BlockSpec((1, C), lambda i: (0, 0)),
                  pl.BlockSpec((1, C), lambda i: (0, 0)),
                  pl.BlockSpec((1, C), lambda i: (0, 0)),
                  pl.BlockSpec((1, C), lambda i: (0, 0))],
        out_specs=pl.BlockSpec((tm, C), lambda i: (i, 0)),
        out_shape=jax.ShapeDtypeStruct((nhw, C), jnp.float32),
        compiler_params=parallel_params,
    )(xf, y.reshape(nhw, C), s2, ss2, g2.reshape(1, C), b2.reshape(1, C))

    return out_flat.reshape(N, H, W, C)


def reference(x, w1, w2, g1, b1, g2, b2):
    """Pure-JAX NHWC reference with the same bf16-operand conv precision."""
    dn = ("NHWC", "HWIO", "NHWC")
    mid = lax.conv_general_dilated(
        x.astype(jnp.bfloat16), w1.reshape(1, 1, *w1.shape).astype(jnp.bfloat16),
        (1, 1), "SAME", dimension_numbers=dn,
        preferred_element_type=jnp.float32)
    mu1 = jnp.mean(mid, axis=(0, 1, 2)); v1 = jnp.var(mid, axis=(0, 1, 2))
    mid = (mid - mu1) / jnp.sqrt(v1 + EPS) * g1 + b1
    mid = jnp.where(mid >= 0, mid, NEG_SLOPE * mid)
    y = lax.conv_general_dilated(
        mid.astype(jnp.bfloat16), w2.astype(jnp.bfloat16),
        (1, 1), "SAME", dimension_numbers=dn,
        preferred_element_type=jnp.float32)
    mu2 = jnp.mean(y, axis=(0, 1, 2)); v2 = jnp.var(y, axis=(0, 1, 2))
    y = (y - mu2) / jnp.sqrt(v2 + EPS) * g2 + b2
    y = y + x
    return jnp.where(y >= 0, y, NEG_SLOPE * y)


if __name__ == "__main__":
    N, H, W, C = 2, 16, 16, 4        # NHWC view of the torch [2, 4, 16, 16] input
    Cm = C // 2

    key = jax.random.PRNGKey(0)
    k = jax.random.split(key, 7)
    x = jax.random.normal(k[0], (N, H, W, C), jnp.float32)
    w1 = 0.2 * jax.random.normal(k[1], (C, Cm), jnp.float32)        # 1x1: [Cin, Cout]
    w2 = 0.2 * jax.random.normal(k[2], (3, 3, Cm, C), jnp.float32)  # 3x3: HWIO
    g1 = 1.0 + 0.1 * jax.random.normal(k[3], (Cm,), jnp.float32)
    b1 = 0.1 * jax.random.normal(k[4], (Cm,), jnp.float32)
    g2 = 1.0 + 0.1 * jax.random.normal(k[5], (C,), jnp.float32)
    b2 = 0.1 * jax.random.normal(k[6], (C,), jnp.float32)

    # row_tile=128 forces a multi-step grid even at this tiny size (exercises
    # the accumulator / pipelining path); real workloads should use >= 512.
    out = jax.block_until_ready(
        residual_block(x, w1, w2, g1, b1, g2, b2, row_tile=128))
    ref = jax.block_until_ready(reference(x, w1, w2, g1, b1, g2, b2))

    assert out.shape == (N, H, W, C)
    np.testing.assert_allclose(np.asarray(out), np.asarray(ref),
                               rtol=1e-3, atol=1e-3)
    print("KERNEL_OK")
</pallas_src>

<mosaic_0001>
module attributes {stable_mosaic.version = 11 : i64} {
  func.func @_conv1_stats_kernel(%arg0: i32, %arg1: memref<128x4xf32, #tpu.memory_space<vmem>>, %arg2: memref<4x2xbf16, #tpu.memory_space<vmem>>, %arg3: memref<128x2xf32, #tpu.memory_space<vmem>>, %arg4: memref<1x2xf32, #tpu.memory_space<vmem>>, %arg5: memref<1x2xf32, #tpu.memory_space<vmem>>) attributes {dimension_semantics = [#tpu.dimension_semantics<arbitrary>], iteration_bounds = array<i64: 4>, scalar_prefetch = 0 : i64, scratch_operands = 0 : i64, tpu.core_type = #tpu.core_type<tc>, window_params = [{transform_indices = @transform_0, window_bounds = array<i64: 128, 4>}, {pipeline_mode = #tpu.pipeline_mode<synchronous>, transform_indices = @transform_1, window_bounds = array<i64: 4, 2>}, {transform_indices = @transform_2, window_bounds = array<i64: 128, 2>}, {pipeline_mode = #tpu.pipeline_mode<synchronous>, transform_indices = @transform_3, window_bounds = array<i64: 1, 2>}, {pipeline_mode = #tpu.pipeline_mode<synchronous>, transform_indices = @transform_4, window_bounds = array<i64: 1, 2>}]} {
    %c0_i32 = arith.constant 0 : i32
    %0 = arith.cmpi eq, %arg0, %c0_i32 : i32
    %1 = arith.extui %0 : i1 to i32
    %c0_i32_0 = arith.constant 0 : i32
    %2 = arith.cmpi ne, %1, %c0_i32_0 : i32
    scf.if %2 {
      %cst_16 = arith.constant 0.000000e+00 : f32
      %19 = vector.broadcast %cst_16 : f32 to vector<1x2xf32>
      %c0_17 = arith.constant 0 : index
      %c0_18 = arith.constant 0 : index
      %20 = vector.load %arg4[%c0_17, %c0_18] : memref<1x2xf32, #tpu.memory_space<vmem>>, vector<1x2xf32>
      tpu.vector_store %arg4[%c0_17, %c0_18], %19 {strides = array<i32>} : memref<1x2xf32, #tpu.memory_space<vmem>>, vector<1x2xf32>,
      %cst_19 = arith.constant 0.000000e+00 : f32
      %21 = vector.broadcast %cst_19 : f32 to vector<1x2xf32>
      %c0_20 = arith.constant 0 : index
      %c0_21 = arith.constant 0 : index
      %22 = vector.load %arg5[%c0_20, %c0_21] : memref<1x2xf32, #tpu.memory_space<vmem>>, vector<1x2xf32>
      tpu.vector_store %arg5[%c0_20, %c0_21], %21 {strides = array<i32>} : memref<1x2xf32, #tpu.memory_space<vmem>>, vector<1x2xf32>,
    } else {
    }
    %c0 = arith.constant 0 : index
    %c0_1 = arith.constant 0 : index
    %3 = vector.load %arg1[%c0, %c0_1] : memref<128x4xf32, #tpu.memory_space<vmem>>, vector<128x4xf32>
    %4 = arith.truncf %3 : vector<128x4xf32> to vector<128x4xbf16>
    %c0_2 = arith.constant 0 : index
    %c0_3 = arith.constant 0 : index
    %5 = vector.load %arg2[%c0_2, %c0_3] : memref<4x2xbf16, #tpu.memory_space<vmem>>, vector<4x2xbf16>
    %cst = arith.constant dense<0.000000e+00> : vector<128x2xf32>
    %6 = tpu.matmul %4, %5, %cst {dimension_numbers = #tpu.dot_dimension_numbers<[1], [0], [0], [1], [0, 0, 1, 1], [], []>} : vector<128x4xbf16>, vector<4x2xbf16>, vector<128x2xf32> -> vector<128x2xf32>
    %c0_4 = arith.constant 0 : index
    %c0_5 = arith.constant 0 : index
    %7 = vector.load %arg3[%c0_4, %c0_5] : memref<128x2xf32, #tpu.memory_space<vmem>>, vector<128x2xf32>
    tpu.vector_store %arg3[%c0_4, %c0_5], %6 {strides = array<i32>} : memref<128x2xf32, #tpu.memory_space<vmem>>, vector<128x2xf32>,
    %c0_6 = arith.constant 0 : index
    %c0_7 = arith.constant 0 : index
    %8 = vector.load %arg4[%c0_6, %c0_7] : memref<1x2xf32, #tpu.memory_space<vmem>>, vector<1x2xf32>
    %cst_8 = arith.constant dense<0.000000e+00> : vector<2xf32>
    %9 = vector.multi_reduction <add>, %6, %cst_8 [0] : vector<128x2xf32> to vector<2xf32>
    %10 = vector.shape_cast %9 : vector<2xf32> to vector<1x2xf32>
    %11 = arith.addf %8, %10 : vector<1x2xf32>
    %c0_9 = arith.constant 0 : index
    %c0_10 = arith.constant 0 : index
    %12 = vector.load %arg4[%c0_9, %c0_10] : memref<1x2xf32, #tpu.memory_space<vmem>>, vector<1x2xf32>
    tpu.vector_store %arg4[%c0_9, %c0_10], %11 {strides = array<i32>} : memref<1x2xf32, #tpu.memory_space<vmem>>, vector<1x2xf32>,
    %c0_11 = arith.constant 0 : index
    %c0_12 = arith.constant 0 : index
    %13 = vector.load %arg5[%c0_11, %c0_12] : memref<1x2xf32, #tpu.memory_space<vmem>>, vector<1x2xf32>
    %14 = arith.mulf %6, %6 : vector<128x2xf32>
    %cst_13 = arith.constant dense<0.000000e+00> : vector<2xf32>
    %15 = vector.multi_reduction <add>, %14, %cst_13 [0] : vector<128x2xf32> to vector<2xf32>
    %16 = vector.shape_cast %15 : vector<2xf32> to vector<1x2xf32>
    %17 = arith.addf %13, %16 : vector<1x2xf32>
    %c0_14 = arith.constant 0 : index
    %c0_15 = arith.constant 0 : index
    %18 = vector.load %arg5[%c0_14, %c0_15] : memref<1x2xf32, #tpu.memory_space<vmem>>, vector<1x2xf32>
    tpu.vector_store %arg5[%c0_14, %c0_15], %17 {strides = array<i32>} : memref<1x2xf32, #tpu.memory_space<vmem>>, vector<1x2xf32>,
    return
  }
  func.func @transform_0(%arg0: i32) -> (i32, i32) {
    %c0_i32 = arith.constant 0 : i32
    %c0_i32_0 = arith.constant 0 : i32
    return %arg0, %c0_i32 : i32, i32
  }
  func.func @transform_1(%arg0: i32) -> (i32, i32) {
    %c0_i32 = arith.constant 0 : i32
    %c0_i32_0 = arith.constant 0 : i32
    %c0_i32_1 = arith.constant 0 : i32
    return %c0_i32, %c0_i32_0 : i32, i32
  }
  func.func @transform_2(%arg0: i32) -> (i32, i32) {
    %c0_i32 = arith.constant 0 : i32
    %c0_i32_0 = arith.constant 0 : i32
    return %arg0, %c0_i32 : i32, i32
  }
  func.func @transform_3(%arg0: i32) -> (i32, i32) {
    %c0_i32 = arith.constant 0 : i32
    %c0_i32_0 = arith.constant 0 : i32
    %c0_i32_1 = arith.constant 0 : i32
    return %c0_i32, %c0_i32_0 : i32, i32
  }
  func.func @transform_4(%arg0: i32) -> (i32, i32) {
    %c0_i32 = arith.constant 0 : i32
    %c0_i32_0 = arith.constant 0 : i32
    %c0_i32_1 = arith.constant 0 : i32
    return %c0_i32, %c0_i32_0 : i32, i32
  }
}

</mosaic_0001>

<llo_original>
// kernel: tpu_custom_call.1
$region0: #{tpu_custom_call.1}
  #allocation0 [shape = 'u32[]', space=smem, size = 0x4, offset = 0x4, fixed_abs, tag = 'smem constant byte address 0x4 - core index']
  #allocation1 [shape = 'u32[144,128]{1,0:T(1,128)}', space=vmem, size = 0x12000, scoped, tag = 'internal scratch']
  %s0 = inlined_call_operand.vmem [shape: f32[512,4], index: 0, kind: input, shape index: {}]
  %s1 = inlined_call_operand.vmem [shape: bf16[4,2], index: 1, kind: input, shape index: {}]
  %s2 = inlined_call_operand.vmem [shape: f32[512,2], index: 2, kind: output, shape index: {0}]
  %s3 = inlined_call_operand.hbm [shape: f32[1,2], index: 3, kind: output, shape index: {1}]
  %s4 = inlined_call_operand.hbm [shape: f32[1,2], index: 4, kind: output, shape index: {2}]
  %5 = xla_tuple %s2, %s3, %s4
  %s6 = sld [smem:[#allocation0]]
  $region61: #{tpu_custom_call.1} parent=0
    _
  %s8 = ssub.s32 1, %s6
  %s9 = scalar_select 0, %s8, %s6
  $region1: #{tpu_custom_call.1} parent=0
    #allocation2 [shape = 'u8[512]{0}', space=vmem, size = 0x400, scoped, tag = 'output window, operand 1, single buffered']
    #allocation3 [shape = 's32[2]{0}', space=sflag, size = 0x8, scoped, tag = 'scoped memory for tpu_custom_call.1']
    #allocation4 [shape = 'u8[512]{0}', space=vmem, size = 0x400, scoped, tag = 'output window, operand 2, single buffered']
    #allocation5 [shape = 's32[1]{0}', space=sflag, size = 0x4, scoped, tag = 'scoped memory for tpu_custom_call.1']
    %10 = vsyncpa [#allocation3], 0
    %11 = vsyncpa [#allocation5], 0
    loop: start=0, step=1, limit=6
    $region2: #{tpu_custom_call.1} parent=1 // loop_pre_header
      _
    $region3: #{tpu_custom_call.1} parent=1 // loop_header
      %s13 = sphi 0, %s17
      %p14 = scmp.ge.s32.totalorder %s13, 6
      %s23 = sphi 0, %s25
      %s26 = sphi 0, %s23
      %s27 = sphi 0, %s26
      %s43 = sphi 0, %s27
      %s47 = sphi 0, %s47
      %s49 = sphi 0, %s47
      %s50 = sphi 0, %s49
      %s64 = sphi 0, %s50
      %s70 = sphi 0, %s72
      %s73 = sphi 0, %s70
      %s74 = sphi 0, %s73
      %s90 = sphi 0, %s74
      %s94 = sphi 0, %s94
      %s96 = sphi 0, %s94
      %s97 = sphi 0, %s96
      %s111 = sphi 0, %s97
      %s115 = sphi 0, %s115
      %s117 = sphi 0, %s115
      %s118 = sphi 0, %s117
      %s132 = sphi 0, %s118
    $region4: #{tpu_custom_call.1} parent=1 // loop_header_branch
      %16 = sbr.rel (%p14) target = $region8
    $region5: #{tpu_custom_call.1} parent=1 // loop_body
      %s18 = ssub.s32 %s13, 1
      %s19 = ssub.s32 %s13, 2
      %s20 = sadd.s32 %s13, 1
      %s21 = ssub.s32 %s13, %s20
      %p22 = scmp.eq.s32.totalorder %s21, 0
      %s24 = sadd.s32 %s23, 1
      %s25 = scalar_select %p22, %s23, %s24
      %p28 = pneg %p22
      %p29 = scmp.eq.s32.totalorder %s13, 3
      %p30 = por %p28, %p29
      %p31 = scmp.ne.s32.totalorder %s23, %s26
      %p32 = scmp.eq.s32.totalorder %s13, 0
      %p33 = por %p31, %p32
      %p34 = scmp.ne.s32.totalorder %s23, %s26
      %p35 = scmp.eq.s32.totalorder %s18, 3
      %p36 = por %p34, %p35
      %p37 = scmp.ne.s32.totalorder %s26, %s27
      %p38 = scmp.eq.s32.totalorder %s18, 0
      %p39 = por %p37, %p38
      %p40 = scmp.ne.s32.totalorder %s26, %s27
      %p41 = scmp.eq.s32.totalorder %s19, 3
      %p42 = por %p40, %p41
      %p44 = scmp.ne.s32.totalorder %s27, %s43
      %p45 = scmp.eq.s32.totalorder %s19, 0
      %p46 = por %p44, %p45
      %s48 = sadd.s32 %s47, 1
      %p51 = scmp.eq.s32.totalorder %s13, 3
      %p52 = scmp.ne.s32.totalorder %s47, %s49
      %p53 = scmp.eq.s32.totalorder %s13, 0
      %p54 = por %p52, %p53
      %p55 = scmp.ne.s32.totalorder %s47, %s49
      %p56 = scmp.eq.s32.totalorder %s18, 3
      %p57 = por %p55, %p56
      %p58 = scmp.ne.s32.totalorder %s49, %s50
      %p59 = scmp.eq.s32.totalorder %s18, 0
      %p60 = por %p58, %p59
      %p61 = scmp.ne.s32.totalorder %s49, %s50
      %p62 = scmp.eq.s32.totalorder %s19, 3
      %p63 = por %p61, %p62
      %p65 = scmp.ne.s32.totalorder %s50, %s64
      %p66 = scmp.eq.s32.totalorder %s19, 0
      %p67 = por %p65, %p66
      %s68 = ssub.s32 %s13, %s20
      %p69 = scmp.eq.s32.totalorder %s68, 0
      %s71 = sadd.s32 %s70, 1
      %s72 = scalar_select %p69, %s70, %s71
      %p75 = pneg %p69
      %p76 = scmp.eq.s32.totalorder %s13, 3
      %p77 = por %p75, %p76
      %p78 = scmp.ne.s32.totalorder %s70, %s73
      %p79 = scmp.eq.s32.totalorder %s13, 0
      %p80 = por %p78, %p79
      %p81 = scmp.ne.s32.totalorder %s70, %s73
      %p82 = scmp.eq.s32.totalorder %s18, 3
      %p83 = por %p81, %p82
      %p84 = scmp.ne.s32.totalorder %s73, %s74
      %p85 = scmp.eq.s32.totalorder %s18, 0
      %p86 = por %p84, %p85
      %p87 = scmp.ne.s32.totalorder %s73, %s74
      %p88 = scmp.eq.s32.totalorder %s19, 3
      %p89 = por %p87, %p88
      %p91 = scmp.ne.s32.totalorder %s74, %s90
      %p92 = scmp.eq.s32.totalorder %s19, 0
      %p93 = por %p91, %p92
      %s95 = sadd.s32 %s94, 1
      %p98 = scmp.eq.s32.totalorder %s13, 3
      %p99 = scmp.ne.s32.totalorder %s94, %s96
      %p100 = scmp.eq.s32.totalorder %s13, 0
      %p101 = por %p99, %p100
      %p102 = scmp.ne.s32.totalorder %s94, %s96
      %p103 = scmp.eq.s32.totalorder %s18, 3
      %p104 = por %p102, %p103
      %p105 = scmp.ne.s32.totalorder %s96, %s97
      %p106 = scmp.eq.s32.totalorder %s18, 0
      %p107 = por %p105, %p106
      %p108 = scmp.ne.s32.totalorder %s96, %s97
      %p109 = scmp.eq.s32.totalorder %s19, 3
      %p110 = por %p108, %p109
      %p112 = scmp.ne.s32.totalorder %s97, %s111
      %p113 = scmp.eq.s32.totalorder %s19, 0
      %p114 = por %p112, %p113
      %s116 = sadd.s32 %s115, 1
      %p119 = scmp.eq.s32.totalorder %s13, 3
      %p120 = scmp.ne.s32.totalorder %s115, %s117
      %p121 = scmp.eq.s32.totalorder %s13, 0
      %p122 = por %p120, %p121
      %p123 = scmp.ne.s32.totalorder %s115, %s117
      %p124 = scmp.eq.s32.totalorder %s18, 3
      %p125 = por %p123, %p124
      %p126 = scmp.ne.s32.totalorder %s117, %s118
      %p127 = scmp.eq.s32.totalorder %s18, 0
      %p128 = por %p126, %p127
      %p129 = scmp.ne.s32.totalorder %s117, %s118
      %p130 = scmp.eq.s32.totalorder %s19, 3
      %p131 = por %p129, %p130
      %p133 = scmp.ne.s32.totalorder %s118, %s132
      %p134 = scmp.eq.s32.totalorder %s19, 0
      %p135 = por %p133, %p134
      %p136 = scmp.le.s32.totalorder 1, %s13
      %p137 = scmp.lt.s32.totalorder %s13, 5
      %p138 = pnand %p136, %p137
      %p139 = pneg %p138
      // Predicated region
      $region9: #{tpu_custom_call.1} parent=5 // pred_check
        _
      $region10: #{tpu_custom_call.1} parent=5 // pred_check_branch
        %141 = sbr.rel (%p138) target = $region12
      $region11: #{tpu_custom_call.1} parent=5 // pred_region
        %s142 = ssub.s32 %s13, 1
        // Predicated region
        $region13: #{tpu_custom_call.1} parent=11 // pred_check
          %p143 = pneg %p60
        $region14: #{tpu_custom_call.1} parent=11 // pred_check_branch
          %145 = sbr.rel (%p143) target = $region16
        $region15: #{tpu_custom_call.1} parent=11 // pred_region
          _
        $region16: #{tpu_custom_call.1} parent=11 // pred_fallthru
          _
      $region12: #{tpu_custom_call.1} parent=5 // pred_fallthru
        _
      %p146 = scmp.lt.s32.totalorder %s13, 4
      // Predicated region
      $region17: #{tpu_custom_call.1} parent=5 // pred_check
        %p147 = pneg %p146
      $region18: #{tpu_custom_call.1} parent=5 // pred_check_branch
        %149 = sbr.rel (%p147) target = $region20
      $region19: #{tpu_custom_call.1} parent=5 // pred_region
        // Predicated region
        $region21: #{tpu_custom_call.1} parent=19 // pred_check
          %p150 = pneg %p33
        $region22: #{tpu_custom_call.1} parent=19 // pred_check_branch
          %152 = sbr.rel (%p150) target = $region24
        $region23: #{tpu_custom_call.1} parent=19 // pred_region
          %s153 = smul.u32 16, %s13
          %p154 = scmp.lt.s32.totalorder %s153, 63
          %s155 = scalar_select %p154, %s153, 63
          %s156 = smul.addr %s155, 8
          %s157 = scalar_lea.vmem %s0, %s156
          %s158 = smul.u32 16, %s13
        $region24: #{tpu_custom_call.1} parent=19 // pred_fallthru
          _
      $region20: #{tpu_custom_call.1} parent=5 // pred_fallthru
        _
      %p159 = scmp.le.s32.totalorder 1, %s13
      %p160 = scmp.lt.s32.totalorder %s13, 5
      %p161 = pnand %p159, %p160
      %p162 = pneg %p161
      // Predicated region
      $region25: #{tpu_custom_call.1} parent=5 // pred_check
        _
      $region26: #{tpu_custom_call.1} parent=5 // pred_check_branch
        %164 = sbr.rel (%p161) target = $region28
      $region27: #{tpu_custom_call.1} parent=5 // pred_region
        %s165 = ssub.s32 %s13, 1
        %s166 = smul.u32 16, %s18
        %p167 = scmp.lt.s32.totalorder %s166, 63
        %s168 = scalar_select %p167, %s166, 63
        %s169 = smul.addr %s168, 8
        %s170 = scalar_lea.vmem %s0, %s169
        %p171 = pneg %p39
        %p172 = pneg %p36
        %p173 = pneg %p60
        %p174 = pneg %p57
        %p175 = pneg %p86
        %p176 = pneg %p83
        %s177 = smul.u32 16, %s18
        %p178 = scmp.lt.s32.totalorder %s177, 63
        %s179 = scalar_select %p178, %s177, 63
        %s180 = smul.addr %s179, 8
        %s181 = scalar_lea.vmem %s2, %s180
        %p182 = pneg %p107
        %p183 = pneg %p104
        %p184 = pneg %p128
        %p185 = pneg %p125
        %s186 = smul.u32 16, %s18
        %p187 = scmp.lt.s32.totalorder %s186, 63
        %s188 = scalar_select %p187, %s186, 63
        %s189 = smul.addr %s188, 8
        %s190 = scalar_lea.vmem %s0, %s189
        %s191 = smul.u32 16, %s18
        %s192 = smul.u32 16, %s18
        %p193 = scmp.lt.s32.totalorder %s192, 63
        %s194 = scalar_select %p193, %s192, 63
        %s195 = smul.addr %s194, 8
        %s196 = scalar_lea.vmem %s2, %s195
        %s197 = smul.u32 16, %s18
        %p199 = scmp.eq.s32.totalorder %s18, 0
        // Predicated region
        $region29: #{tpu_custom_call.1} parent=27 // pred_check
          %p200 = pneg %p199
        $region30: #{tpu_custom_call.1} parent=27 // pred_check_branch
          %202 = sbr.rel (%p200) target = $region32
        $region31: #{tpu_custom_call.1} parent=27 // pred_region
          %vm203 = vcmask 8192
          %204 = vst.msk [vmem:[#allocation2] sm:$0x1] %vm203, 0.0
          %205 = vst.msk [vmem:[#allocation4] sm:$0x1] %vm203, 0.0
        $region32: #{tpu_custom_call.1} parent=27 // pred_fallthru
          _
        %v206 = vld [vmem:[%s190] sm:$0xff]
        %v207 = vld [vmem:[%s190 + $0x8] sm:$0xff]
        %v208 = vld [vmem:[%s190 + $0x10] sm:$0xff]
        %v209 = vld [vmem:[%s190 + $0x18] sm:$0xff]
        %v210 = vld [vmem:[%s190 + $0x20] sm:$0xff]
        %v211 = vld [vmem:[%s190 + $0x28] sm:$0xff]
        %v212 = vld [vmem:[%s190 + $0x30] sm:$0xff]
        %v213 = vld [vmem:[%s190 + $0x38] sm:$0xff]
        %v214 = vld [vmem:[%s190 + $0x40] sm:$0xff]
        %v215 = vld [vmem:[%s190 + $0x48] sm:$0xff]
        %v216 = vld [vmem:[%s190 + $0x50] sm:$0xff]
        %v217 = vld [vmem:[%s190 + $0x58] sm:$0xff]
        %v218 = vld [vmem:[%s190 + $0x60] sm:$0xff]
        %v219 = vld [vmem:[%s190 + $0x68] sm:$0xff]
        %v220 = vld [vmem:[%s190 + $0x70] sm:$0xff]
        %v221 = vld [vmem:[%s190 + $0x78] sm:$0xff]
        %v222 = vpack.c.bf16 %v207, %v206
        %v223 = vpack.c.bf16 %v209, %v208
        %v224 = vpack.c.bf16 %v211, %v210
        %v225 = vpack.c.bf16 %v213, %v212
        %v226 = vpack.c.bf16 %v215, %v214
        %v227 = vpack.c.bf16 %v217, %v216
        %v228 = vpack.c.bf16 %v219, %v218
        %v229 = vpack.c.bf16 %v221, %v220
        %v230 = vld [vmem:[%s1] sm:$0x3]
        %vm231 = vcmask 31744
        %v233 = vsel %vm231, %v222, 0
        %v236 = vsel %vm231, %v223, 0
        %v239 = vsel %vm231, %v224, 0
        %v242 = vsel %vm231, %v225, 0
        %v245 = vsel %vm231, %v226, 0
        %v248 = vsel %vm231, %v227, 0
        %v251 = vsel %vm231, %v228, 0
        %v254 = vsel %vm231, %v229, 0
        %vm256 = vcmask 1041408
        %v258 = vsel %vm256, %v230, 0
        %260 = vmatprep.subr.bf16.mxu0 0
        %261 = vmatpush1.bf16.msra.mxu0 %v258
        %262 = vmatprep.subr.bf16.mxu0 0
        %263 = vmatpush1.bf16.msra.mxu0 0
        %264 = vmatprep.subr.bf16.mxu0 0
        %265 = vmatpush1.bf16.msra.mxu0 0
        %266 = vmatprep.subr.bf16.mxu0 0
        %267 = vmatpush1.bf16.msra.mxu0 0
        %268 = vmatprep.subr.bf16.mxu0 0
        %269 = vmatpush1.bf16.msra.mxu0 0
        %270 = vmatprep.subr.bf16.mxu0 0
        %271 = vmatpush1.bf16.msra.mxu0 0
        %272 = vmatprep.subr.bf16.mxu0 0
        %273 = vmatpush1.bf16.msra.mxu0 0
        %274 = vmatprep.subr.bf16.mxu0 0
        %275 = vmatpush1.bf16.msra.mxu0 0
        %276 = vmatprep.subr.bf16.mxu0 0
        %277 = vmatpush1.bf16.msra.mxu0 0
        %278 = vmatprep.subr.bf16.mxu0 0
        %279 = vmatpush1.bf16.msra.mxu0 0
        %280 = vmatprep.subr.bf16.mxu0 0
        %281 = vmatpush1.bf16.msra.mxu0 0
        %282 = vmatprep.subr.bf16.mxu0 0
        %283 = vmatpush1.bf16.msra.mxu0 0
        %284 = vmatprep.subr.bf16.mxu0 0
        %285 = vmatpush1.bf16.msra.mxu0 0
        %286 = vmatprep.subr.bf16.mxu0 0
        %287 = vmatpush1.bf16.msra.mxu0 0
        %288 = vmatprep.subr.bf16.mxu0 0
        %289 = vmatpush1.bf16.msra.mxu0 0
        %290 = vmatprep.subr.bf16.mxu0 0
        %291 = vmatpush1.bf16.msra.mxu0 0
        %292 = vmatprep.mubr.bf16.mxu0 0
        %293 = vmatmul.mubr.bf16.gmra.mrb[0].mxu0 %v233
        %v294 = vpop.f32.mrb[0].mxu0
        %v295 = vadd.f32 0.0, %v294
        %v296 = vpop.f32.mrb[0].mxu0
        %v297 = vpop.f32.mrb[0].mxu0
        %v298 = vadd.f32 0.0, %v297
        %v299 = vpop.f32.mrb[0].mxu0
        %300 = vmatprep.mubr.bf16.mxu0 0
        %301 = vmatmul.mubr.bf16.gmra.mrb[0].mxu0 %v236
        %v302 = vpop.f32.mrb[0].mxu0
        %v303 = vadd.f32 0.0, %v302
        %v304 = vpop.f32.mrb[0].mxu0
        %v305 = vpop.f32.mrb[0].mxu0
        %v306 = vadd.f32 0.0, %v305
        %v307 = vpop.f32.mrb[0].mxu0
        %308 = vmatprep.mubr.bf16.mxu0 0
        %309 = vmatmul.mubr.bf16.gmra.mrb[0].mxu0 %v239
        %v310 = vpop.f32.mrb[0].mxu0
        %v311 = vadd.f32 0.0, %v310
        %v312 = vpop.f32.mrb[0].mxu0
        %v313 = vpop.f32.mrb[0].mxu0
        %v314 = vadd.f32 0.0, %v313
        %v315 = vpop.f32.mrb[0].mxu0
        %316 = vmatprep.mubr.bf16.mxu0 0
        %317 = vmatmul.mubr.bf16.gmra.mrb[0].mxu0 %v242
        %v318 = vpop.f32.mrb[0].mxu0
        %v319 = vadd.f32 0.0, %v318
        %v320 = vpop.f32.mrb[0].mxu0
        %v321 = vpop.f32.mrb[0].mxu0
        %v322 = vadd.f32 0.0, %v321
        %v323 = vpop.f32.mrb[0].mxu0
        %324 = vmatprep.mubr.bf16.mxu0 0
        %325 = vmatmul.mubr.bf16.gmra.mrb[0].mxu0 %v245
        %v326 = vpop.f32.mrb[0].mxu0
        %v327 = vadd.f32 0.0, %v326
        %v328 = vpop.f32.mrb[0].mxu0
        %v329 = vpop.f32.mrb[0].mxu0
        %v330 = vadd.f32 0.0, %v329
        %v331 = vpop.f32.mrb[0].mxu0
        %332 = vmatprep.mubr.bf16.mxu0 0
        %333 = vmatmul.mubr.bf16.gmra.mrb[0].mxu0 %v248
        %v334 = vpop.f32.mrb[0].mxu0
        %v335 = vadd.f32 0.0, %v334
        %v336 = vpop.f32.mrb[0].mxu0
        %v337 = vpop.f32.mrb[0].mxu0
        %v338 = vadd.f32 0.0, %v337
        %v339 = vpop.f32.mrb[0].mxu0
        %340 = vmatprep.mubr.bf16.mxu0 0
        %341 = vmatmul.mubr.bf16.gmra.mrb[0].mxu0 %v251
        %v342 = vpop.f32.mrb[0].mxu0
        %v343 = vadd.f32 0.0, %v342
        %v344 = vpop.f32.mrb[0].mxu0
        %v345 = vpop.f32.mrb[0].mxu0
        %v346 = vadd.f32 0.0, %v345
        %v347 = vpop.f32.mrb[0].mxu0
        %348 = vmatprep.mubr.bf16.mxu0 0
        %349 = vmatmul.mubr.bf16.gmra.mrb[0].mxu0 %v254
        %v350 = vpop.f32.mrb[0].mxu0
        %v351 = vadd.f32 0.0, %v350
        %v352 = vpop.f32.mrb[0].mxu0
        %v353 = vpop.f32.mrb[0].mxu0
        %v354 = vadd.f32 0.0, %v353
        %v355 = vpop.f32.mrb[0].mxu0
        %356 = vdwg.mxu0
        %vm357 = vcmask 15360
        %358 = vst.msk [vmem:[%s196] sm:$0xff] %vm357, %v295
        %359 = vst.msk [vmem:[%s196 + $0x8] sm:$0xff] %vm357, %v298
        %360 = vst.msk [vmem:[%s196 + $0x10] sm:$0xff] %vm357, %v303
        %361 = vst.msk [vmem:[%s196 + $0x18] sm:$0xff] %vm357, %v306
        %362 = vst.msk [vmem:[%s196 + $0x20] sm:$0xff] %vm357, %v311
        %363 = vst.msk [vmem:[%s196 + $0x28] sm:$0xff] %vm357, %v314
        %364 = vst.msk [vmem:[%s196 + $0x30] sm:$0xff] %vm357, %v319
        %365 = vst.msk [vmem:[%s196 + $0x38] sm:$0xff] %vm357, %v322
        %366 = vst.msk [vmem:[%s196 + $0x40] sm:$0xff] %vm357, %v327
        %367 = vst.msk [vmem:[%s196 + $0x48] sm:$0xff] %vm357, %v330
        %368 = vst.msk [vmem:[%s196 + $0x50] sm:$0xff] %vm357, %v335
        %369 = vst.msk [vmem:[%s196 + $0x58] sm:$0xff] %vm357, %v338
        %370 = vst.msk [vmem:[%s196 + $0x60] sm:$0xff] %vm357, %v343
        %371 = vst.msk [vmem:[%s196 + $0x68] sm:$0xff] %vm357, %v346
        %372 = vst.msk [vmem:[%s196 + $0x70] sm:$0xff] %vm357, %v351
        %373 = vst.msk [vmem:[%s196 + $0x78] sm:$0xff] %vm357, %v354
        %v374 = vld [vmem:[#allocation2] sm:$0x1]
        %v375 = vsel %vm357, %v295, 0.0
        %v376 = vsel %vm357, %v298, 0.0
        %v377 = vadd.f32 %v375, %v376
        %v378 = vsel %vm357, %v303, 0.0
        %v379 = vadd.f32 %v377, %v378
        %v380 = vsel %vm357, %v306, 0.0
        %v381 = vadd.f32 %v379, %v380
        %v382 = vsel %vm357, %v311, 0.0
        %v383 = vadd.f32 %v381, %v382
        %v384 = vsel %vm357, %v314, 0.0
        %v385 = vadd.f32 %v383, %v384
        %v386 = vsel %vm357, %v319, 0.0
        %v387 = vadd.f32 %v385, %v386
        %v388 = vsel %vm357, %v322, 0.0
        %v389 = vadd.f32 %v387, %v388
        %v390 = vsel %vm357, %v327, 0.0
        %v391 = vadd.f32 %v389, %v390
        %v392 = vsel %vm357, %v330, 0.0
        %v393 = vadd.f32 %v391, %v392
        %v394 = vsel %vm357, %v335, 0.0
        %v395 = vadd.f32 %v393, %v394
        %v396 = vsel %vm357, %v338, 0.0
        %v397 = vadd.f32 %v395, %v396
        %v398 = vsel %vm357, %v343, 0.0
        %v399 = vadd.f32 %v397, %v398
        %v400 = vsel %vm357, %v346, 0.0
        %v401 = vadd.f32 %v399, %v400
        %v402 = vsel %vm357, %v351, 0.0
        %v403 = vadd.f32 %v401, %v402
        %v404 = vsel %vm357, %v354, 0.0
        %v405 = vadd.f32 %v403, %v404
        %v406 = vrot.slane %v405, 4
        %v407 = vadd.f32 %v405, %v406
        %v408 = vrot.slane %v407, 2
        %v409 = vadd.f32 %v407, %v408
        %v410 = vrot.slane %v409, 1
        %v411 = vadd.f32 %v409, %v410
        %v412 = vadd.f32 %v374, %v411
        %vm413 = vcmask 8192
        %414 = vst.msk [vmem:[#allocation2] sm:$0x1] %vm413, %v412
        %v415 = vld [vmem:[#allocation4] sm:$0x1]
        %v416 = vmul.f32 %v295, %v295
        %v417 = vmul.f32 %v298, %v298
        %v418 = vmul.f32 %v303, %v303
        %v419 = vmul.f32 %v306, %v306
        %v420 = vmul.f32 %v311, %v311
        %v421 = vmul.f32 %v314, %v314
        %v422 = vmul.f32 %v319, %v319
        %v423 = vmul.f32 %v322, %v322
        %v424 = vmul.f32 %v327, %v327
        %v425 = vmul.f32 %v330, %v330
        %v426 = vmul.f32 %v335, %v335
        %v427 = vmul.f32 %v338, %v338
        %v428 = vmul.f32 %v343, %v343
        %v429 = vmul.f32 %v346, %v346
        %v430 = vmul.f32 %v351, %v351
        %v431 = vmul.f32 %v354, %v354
        %v432 = vsel %vm357, %v416, 0.0
        %v433 = vsel %vm357, %v417, 0.0
        %v434 = vadd.f32 %v432, %v433
        %v435 = vsel %vm357, %v418, 0.0
        %v436 = vadd.f32 %v434, %v435
        %v437 = vsel %vm357, %v419, 0.0
        %v438 = vadd.f32 %v436, %v437
        %v439 = vsel %vm357, %v420, 0.0
        %v440 = vadd.f32 %v438, %v439
        %v441 = vsel %vm357, %v421, 0.0
        %v442 = vadd.f32 %v440, %v441
        %v443 = vsel %vm357, %v422, 0.0
        %v444 = vadd.f32 %v442, %v443
        %v445 = vsel %vm357, %v423, 0.0
        %v446 = vadd.f32 %v444, %v445
        %v447 = vsel %vm357, %v424, 0.0
        %v448 = vadd.f32 %v446, %v447
        %v449 = vsel %vm357, %v425, 0.0
        %v450 = vadd.f32 %v448, %v449
        %v451 = vsel %vm357, %v426, 0.0
        %v452 = vadd.f32 %v450, %v451
        %v453 = vsel %vm357, %v427, 0.0
        %v454 = vadd.f32 %v452, %v453
        %v455 = vsel %vm357, %v428, 0.0
        %v456 = vadd.f32 %v454, %v455
        %v457 = vsel %vm357, %v429, 0.0
        %v458 = vadd.f32 %v456, %v457
        %v459 = vsel %vm357, %v430, 0.0
        %v460 = vadd.f32 %v458, %v459
        %v461 = vsel %vm357, %v431, 0.0
        %v462 = vadd.f32 %v460, %v461
        %v463 = vrot.slane %v462, 4
        %v464 = vadd.f32 %v462, %v463
        %v465 = vrot.slane %v464, 2
        %v466 = vadd.f32 %v464, %v465
        %v467 = vrot.slane %v466, 1
        %v468 = vadd.f32 %v466, %v467
        %v469 = vadd.f32 %v415, %v468
        %470 = vst.msk [vmem:[#allocation4] sm:$0x1] %vm413, %v469
        %s471 = smul.u32 16, %s18
        %p472 = scmp.lt.s32.totalorder %s471, 63
        %s473 = scalar_select %p472, %s471, 63
        %s474 = smul.addr %s473, 8
        %s475 = scalar_lea.vmem %s2, %s474
        // Predicated region
        $region33: #{tpu_custom_call.1} parent=27 // pred_check
          %p476 = pneg %p83
        $region34: #{tpu_custom_call.1} parent=27 // pred_check_branch
          %478 = sbr.rel (%p476) target = $region36
        $region35: #{tpu_custom_call.1} parent=27 // pred_region
          %s479 = smul.u32 16, %s18
        $region36: #{tpu_custom_call.1} parent=27 // pred_fallthru
          _
        // Predicated region
        $region37: #{tpu_custom_call.1} parent=27 // pred_check
          %p480 = pneg %p104
        $region38: #{tpu_custom_call.1} parent=27 // pred_check_branch
          %482 = sbr.rel (%p480) target = $region40
        $region39: #{tpu_custom_call.1} parent=27 // pred_region
          %s484 = ssub.s32 16, 16
          %485 = vsyncadd [#allocation3], %s484
          %s487 = sshll.u32 [#allocation2], 4
          %s488 = int_to_ptr.vmem [resolvable:$true] %s487
          %490 = dma.vmem_to_hbm [thread:$0]  %s488, 16, %s3, [#allocation3]
        $region40: #{tpu_custom_call.1} parent=27 // pred_fallthru
          _
        // Predicated region
        $region41: #{tpu_custom_call.1} parent=27 // pred_check
          %p491 = pneg %p125
        $region42: #{tpu_custom_call.1} parent=27 // pred_check_branch
          %493 = sbr.rel (%p491) target = $region44
        $region43: #{tpu_custom_call.1} parent=27 // pred_region
          %s495 = ssub.s32 16, 16
          %496 = vsyncadd [#allocation5], %s495
          %s498 = sshll.u32 [#allocation4], 4
          %s499 = int_to_ptr.vmem [resolvable:$true] %s498
          %501 = dma.vmem_to_hbm [thread:$0]  %s499, 16, %s4, [#allocation5]
        $region44: #{tpu_custom_call.1} parent=27 // pred_fallthru
          _
        // Predicated region
        $region45: #{tpu_custom_call.1} parent=27 // pred_check
          %p502 = pneg %p104
        $region46: #{tpu_custom_call.1} parent=27 // pred_check_branch
          %504 = sbr.rel (%p502) target = $region48
        $region47: #{tpu_custom_call.1} parent=27 // pred_region
          %505 = dma.done [#allocation3], 16
        $region48: #{tpu_custom_call.1} parent=27 // pred_fallthru
          _
        // Predicated region
        $region49: #{tpu_custom_call.1} parent=27 // pred_check
          %p506 = pneg %p125
        $region50: #{tpu_custom_call.1} parent=27 // pred_check_branch
          %508 = sbr.rel (%p506) target = $region52
        $region51: #{tpu_custom_call.1} parent=27 // pred_region
          %509 = dma.done [#allocation5], 16
        $region52: #{tpu_custom_call.1} parent=27 // pred_fallthru
          _
      $region28: #{tpu_custom_call.1} parent=5 // pred_fallthru
        _
      %p510 = scmp.le.s32.totalorder 2, %s13
      // Predicated region
      $region53: #{tpu_custom_call.1} parent=5 // pred_check
        %p511 = pneg %p510
      $region54: #{tpu_custom_call.1} parent=5 // pred_check_branch
        %513 = sbr.rel (%p511) target = $region56
      $region55: #{tpu_custom_call.1} parent=5 // pred_region
        %s514 = ssub.s32 %s13, 2
        // Predicated region
        $region57: #{tpu_custom_call.1} parent=55 // pred_check
          %p515 = pneg %p89
        $region58: #{tpu_custom_call.1} parent=55 // pred_check_branch
          %517 = sbr.rel (%p515) target = $region60
        $region59: #{tpu_custom_call.1} parent=55 // pred_region
          %s518 = smul.u32 16, %s19
          %p519 = scmp.lt.s32.totalorder %s518, 63
          %s520 = scalar_select %p519, %s518, 63
          %s521 = smul.addr %s520, 8
          %s522 = scalar_lea.vmem %s2, %s521
        $region60: #{tpu_custom_call.1} parent=55 // pred_fallthru
          _
      $region56: #{tpu_custom_call.1} parent=5 // pred_fallthru
        _
    $region6: #{tpu_custom_call.1} parent=1 // loop_footer
      %s17 = sadd.s32 1, %s13
    $region7: #{tpu_custom_call.1} parent=1 // loop_footer_branch
      %12 = sbr.rel target = $region3
    $region8: #{tpu_custom_call.1} parent=1 // loop_exit
      _
    %523 = vsyncpa [#allocation3], 1
    %s524 = scalar_lea.sflag [#allocation3], 1
    %525 = vsyncpa %s524, 1
    %526 = vsyncpa [#allocation5], 1

</llo_original>
